<compile_context>
chip_gen: v6e
topology: v6e:2x2x1
jax: 0.10.0
libtpu: 0.0.40
codegen_flags: <defaults>
</compile_context>

<pallas_src>
import functools

import jax
import jax.numpy as jnp
from jax import lax
from jax.experimental import pallas as pl
from jax.experimental.pallas import tpu as pltpu

_MiB = 1024 * 1024


def _vmem_capacity_bytes() -> int:
    """Physical per-core VMEM, with a v7x-safe fallback (64 MiB)."""
    try:
        cap = getattr(pltpu.get_tpu_info(), "vmem_capacity_bytes", None)
        if cap:
            return int(cap)
    except Exception:
        pass
    return 64 * _MiB


def _ccel_kernel(ei_ref, x_ref, out_ref, *, n_total: int, tile_n: int,
                 num_classes: int):
    # ei_ref : (1,) int32 in SMEM (scalar-prefetched except_index)
    # x_ref  : (tile_n, C) logits tile in VMEM (native dtype, e.g. bf16)
    # out_ref: (8, 128) f32 block holding this tile's partial loss *sum* (splat)
    i = pl.program_id(0)
    xv = x_ref[...]  # native dtype; no full-tile f32 copy is kept live

    # Row max on the native-dtype tile (max is exact); upcast only the result.
    m = jnp.max(xv, axis=1, keepdims=True).astype(jnp.float32)       # (TN, 1)

    # exp(x - m) in f32; the upcast/subtract fuse into the exp input, so `e`
    # is the only live tile-sized f32 intermediate.
    e = jnp.exp(xv.astype(jnp.float32) - m)                          # (TN, C)
    denom = jnp.sum(e, axis=1, keepdims=True)                        # (TN, 1)

    # Except-column logit via a (1, C) lane mask and a native-dtype
    # select/reduce: exactly one nonzero per row -> sum is exact in any float
    # dtype.  e_t is then a single exp per *row* (O(TN) EUP work).
    col = lax.broadcasted_iota(jnp.int32, (1, num_classes), 1)
    sel = jnp.where(col == ei_ref[0], xv, jnp.zeros((), dtype=xv.dtype))
    x_t = jnp.sum(sel, axis=1, keepdims=True).astype(jnp.float32)    # (TN, 1)
    e_t = jnp.exp(x_t - m)                                           # (TN, 1)

    # Keep the reciprocal exact: -log(1 - p_t + 1e-4) is steep as p_t -> 1.
    p_t = e_t * pl.reciprocal(denom, approx=False)                   # (TN, 1)
    loss = -jnp.log(1.0 - p_t + 1.0e-4)                              # (TN, 1)

    # Mask padded rows of the last partial tile.  Must stay a *select* applied
    # before the sum so garbage/NaN rows cannot propagate.
    row = i * tile_n + lax.broadcasted_iota(jnp.int32, loss.shape, 0)
    loss = jnp.where(row < n_total, loss, 0.0)

    # Splat the per-tile partial sum across a lane-dense (8, 128) block:
    # unmasked full-vreg store; tiles stay independent ("parallel" grid axis).
    out_ref[...] = jnp.full(out_ref.shape, jnp.sum(loss), dtype=out_ref.dtype)


def complement_cross_entropy_loss(x: jax.Array, except_index, *, tile_n=None):
    """x: (N, C) logits (any float dtype). Returns scalar f32 loss (mean)."""
    n, c = x.shape
    itemsize = jnp.dtype(x.dtype).itemsize
    # Sublane packing granularity: 8 rows for 4-byte, 16 for 2-byte, 32 for 1B.
    sublane_pack = 8 * max(1, 4 // max(itemsize, 1))

    # --- generation-aware VMEM budget --------------------------------------
    # Physical VMEM: 128 MiB (v5e/v6e) or 64 MiB (v7x).  Leave 16 MiB headroom
    # and never ask for more than 112 MiB.
    vmem_cap = _vmem_capacity_bytes()
    vmem_limit = max(32 * _MiB, min(112 * _MiB, vmem_cap - 16 * _MiB))

    # Per-step working set (bytes per row of the tile):
    #   2*C*itemsize : double-buffered native-dtype input tile
    #   1*C*itemsize : native-dtype select temp for the except-column extract
    #   2*C*4        : f32 `e` + one fused f32 temp (conservative)
    # Keep the tile under ~75% of the scoped limit for compiler scratch.
    bytes_per_row = c * (3 * itemsize + 8)
    tile_budget = (vmem_limit * 3) // 4

    if tile_n is None:
        tile_n = min(2048, max(sublane_pack, tile_budget // bytes_per_row))
        # Expose >= 2 tiles whenever N allows, so the "parallel" grid axis can
        # engage both TensorCores on v7x (no effect on 1-TC v5e/v6e).
        if n > sublane_pack:
            half = ((n + 1) // 2 + sublane_pack - 1) // sublane_pack * sublane_pack
            tile_n = min(tile_n, half)
    tile_n = max(sublane_pack, (int(tile_n) // sublane_pack) * sublane_pack)
    if tile_n >= n:
        tile_n = n  # full-extent block is always a legal block shape
    num_tiles = pl.cdiv(n, tile_n)

    ei = jnp.asarray([except_index], dtype=jnp.int32)
    kernel = functools.partial(_ccel_kernel, n_total=n, tile_n=tile_n,
                               num_classes=c)

    cost = pl.CostEstimate(
        flops=5 * n * c + 8 * n,
        transcendentals=n * c + 2 * n,      # exp per element; exp+log per row
        bytes_accessed=n * c * itemsize + num_tiles * 8 * 128 * 4 + 4,
    )

    partials = pl.pallas_call(
        kernel,
        out_shape=jax.ShapeDtypeStruct((num_tiles * 8, 128), jnp.float32),
        grid_spec=pltpu.PrefetchScalarGridSpec(
            num_scalar_prefetch=1,
            grid=(num_tiles,),
            # TODO(synk): add pipeline_mode=pl.Buffered(3) on the input spec if
            # an xprof trace shows exposed input DMA at small C / small tiles
            # (re-budget VMEM on v7x first).
            in_specs=[pl.BlockSpec((tile_n, c), lambda i, ei_ref: (i, 0))],
            out_specs=pl.BlockSpec((8, 128), lambda i, ei_ref: (i, 0)),
        ),
        compiler_params=pltpu.CompilerParams(
            dimension_semantics=("parallel",),
            vmem_limit_bytes=int(vmem_limit),
        ),
        cost_estimate=cost,
    )(ei, x)

    # Tiny wrapper-side reduction over per-tile partial sums; divide by true N.
    tile_sums = partials.reshape(num_tiles, 8, 128)[:, 0, 0]
    return jnp.sum(tile_sums) / jnp.float32(n)


if __name__ == "__main__":
    key = jax.random.PRNGKey(0)
    N, C = 20, 16
    except_index = 3

    x = jax.random.normal(key, (N, C), dtype=jnp.float32)
    p_ref = jax.nn.softmax(x, axis=1)
    ref = jnp.mean(-jnp.log(1.0 - p_ref[:, except_index] + 1e-4))

    # Forced small tile (3 grid steps, last one partial): exercises padded-row
    # masking and the per-tile partial-sum path.
    loss = complement_cross_entropy_loss(x, except_index, tile_n=8)
    jax.block_until_ready(loss)
    assert jnp.allclose(loss, ref, atol=1e-5, rtol=1e-5), (loss, ref)

    # Default auto-budgeted tile: exercises the generation-aware VMEM budget
    # and the >=2-tile megacore split (N=20 -> 2 tiles of 16 rows).
    loss_auto = complement_cross_entropy_loss(x, except_index)
    jax.block_until_ready(loss_auto)
    assert jnp.allclose(loss_auto, ref, atol=1e-5, rtol=1e-5), (loss_auto, ref)

    # bf16 storage path: native-dtype DMA + native-dtype column select, with
    # f32 math for exp/sum/log inside the kernel.
    x_bf16 = x.astype(jnp.bfloat16)
    p_ref16 = jax.nn.softmax(x_bf16.astype(jnp.float32), axis=1)
    ref16 = jnp.mean(-jnp.log(1.0 - p_ref16[:, except_index] + 1e-4))
    loss_bf16 = complement_cross_entropy_loss(x_bf16, except_index, tile_n=16)
    jax.block_until_ready(loss_bf16)
    assert jnp.allclose(loss_bf16, ref16, atol=1e-5, rtol=1e-5), (loss_bf16, ref16)

    print("KERNEL_OK")
</pallas_src>

<mosaic_0001>
module attributes {stable_mosaic.version = 11 : i64} {
  func.func @_ccel_kernel(%arg0: i32, %arg1: memref<1xi32, #tpu.memory_space<smem>>, %arg2: memref<8x16xf32, #tpu.memory_space<vmem>>, %arg3: memref<8x128xf32, #tpu.memory_space<vmem>>) attributes {dimension_semantics = [#tpu.dimension_semantics<parallel>], iteration_bounds = array<i64: 3>, scalar_prefetch = 1 : i64, scratch_operands = 0 : i64, tpu.core_type = #tpu.core_type<tc>, window_params = [{transform_indices = @transform_0, window_bounds = array<i64: 8, 16>}, {transform_indices = @transform_1, window_bounds = array<i64: 8, 128>}]} {
    %c0 = arith.constant 0 : index
    %c0_0 = arith.constant 0 : index
    %0 = vector.load %arg2[%c0, %c0_0] : memref<8x16xf32, #tpu.memory_space<vmem>>, vector<8x16xf32>
    %cst = arith.constant dense<0xFF800000> : vector<8xf32>
    %1 = vector.multi_reduction <maximumf>, %0, %cst [1] : vector<8x16xf32> to vector<8xf32>
    %2 = vector.shape_cast %1 : vector<8xf32> to vector<8x1xf32>
    %3 = vector.broadcast %2 : vector<8x1xf32> to vector<8x16xf32>
    %4 = arith.subf %0, %3 : vector<8x16xf32>
    %5 = math.exp %4 : vector<8x16xf32>
    %cst_1 = arith.constant dense<0.000000e+00> : vector<8xf32>
    %6 = vector.multi_reduction <add>, %5, %cst_1 [1] : vector<8x16xf32> to vector<8xf32>
    %7 = vector.shape_cast %6 : vector<8xf32> to vector<8x1xf32>
    %8 = tpu.iota {dimensions = array<i32: 1>} : vector<1x16xi32>
    %c0_2 = arith.constant 0 : index
    %9 = memref.load %arg1[%c0_2] : memref<1xi32, #tpu.memory_space<smem>>
    %10 = vector.broadcast %9 : i32 to vector<1x16xi32>
    %11 = arith.cmpi eq, %8, %10 : vector<1x16xi32>
    %cst_3 = arith.constant 0.000000e+00 : f32
    %12 = vector.shape_cast %11 : vector<1x16xi1> to vector<1x16xi1>
    %13 = vector.broadcast %12 : vector<1x16xi1> to vector<8x16xi1>
    %14 = vector.broadcast %cst_3 : f32 to vector<8x16xf32>
    %15 = arith.select %13, %0, %14 : vector<8x16xi1>, vector<8x16xf32>
    %cst_4 = arith.constant dense<0.000000e+00> : vector<8xf32>
    %16 = vector.multi_reduction <add>, %15, %cst_4 [1] : vector<8x16xf32> to vector<8xf32>
    %17 = vector.shape_cast %16 : vector<8xf32> to vector<8x1xf32>
    %18 = arith.subf %17, %2 : vector<8x1xf32>
    %19 = math.exp %18 : vector<8x1xf32>
    %20 = tpu.reciprocal %7 : vector<8x1xf32> -> vector<8x1xf32>
    %21 = arith.mulf %19, %20 : vector<8x1xf32>
    %cst_5 = arith.constant 1.000000e+00 : f32
    %22 = vector.broadcast %cst_5 : f32 to vector<8x1xf32>
    %23 = arith.subf %22, %21 : vector<8x1xf32>
    %cst_6 = arith.constant 9.99999974E-5 : f32
    %24 = vector.broadcast %cst_6 : f32 to vector<8x1xf32>
    %25 = arith.addf %23, %24 : vector<8x1xf32>
    %26 = math.log %25 : vector<8x1xf32>
    %cst_7 = arith.constant 0.000000e+00 : f32
    %27 = vector.broadcast %cst_7 : f32 to vector<8x1xf32>
    %28 = arith.subf %27, %26 : vector<8x1xf32>
    %c8_i32 = arith.constant 8 : i32
    %29 = arith.muli %arg0, %c8_i32 : i32
    %30 = tpu.iota {dimensions = array<i32: 0>} : vector<8x1xi32>
    %31 = vector.broadcast %29 : i32 to vector<8x1xi32>
    %32 = arith.addi %31, %30 : vector<8x1xi32>
    %c20_i32 = arith.constant 20 : i32
    %33 = vector.broadcast %c20_i32 : i32 to vector<8x1xi32>
    %34 = arith.cmpi slt, %32, %33 : vector<8x1xi32>
    %cst_8 = arith.constant 0.000000e+00 : f32
    %35 = vector.broadcast %cst_8 : f32 to vector<8x1xf32>
    %36 = arith.select %34, %28, %35 : vector<8x1xi1>, vector<8x1xf32>
    %37 = vector.shape_cast %36 : vector<8x1xf32> to vector<1x8x1xf32>
    %cst_9 = arith.constant dense<0.000000e+00> : vector<1xf32>
    %38 = vector.multi_reduction <add>, %37, %cst_9 [1, 2] : vector<1x8x1xf32> to vector<1xf32>
    %39 = vector.shape_cast %38 : vector<1xf32> to vector<1x1x1xf32>
    %40 = vector.extract %39[0, 0, 0] : f32 from vector<1x1x1xf32>
    %41 = vector.broadcast %40 : f32 to vector<8x128xf32>
    %c0_10 = arith.constant 0 : index
    %c0_11 = arith.constant 0 : index
    %42 = vector.load %arg3[%c0_10, %c0_11] : memref<8x128xf32, #tpu.memory_space<vmem>>, vector<8x128xf32>
    tpu.vector_store %arg3[%c0_10, %c0_11], %41 {strides = array<i32>} : memref<8x128xf32, #tpu.memory_space<vmem>>, vector<8x128xf32>,
    return
  }
  func.func @transform_0(%arg0: i32, %arg1: memref<1xi32, #tpu.memory_space<smem>>) -> (i32, i32) {
    %c0_i32 = arith.constant 0 : i32
    %c0_i32_0 = arith.constant 0 : i32
    return %arg0, %c0_i32 : i32, i32
  }
  func.func @transform_1(%arg0: i32, %arg1: memref<1xi32, #tpu.memory_space<smem>>) -> (i32, i32) {
    %c0_i32 = arith.constant 0 : i32
    %c0_i32_0 = arith.constant 0 : i32
    return %arg0, %c0_i32 : i32, i32
  }
}

</mosaic_0001>

<llo_original>
// kernel: tpu_custom_call.1
$region0: #{tpu_custom_call.1}
  #allocation0 [shape = 'u32[]', space=smem, size = 0x4, offset = 0x4, fixed_abs, tag = 'smem constant byte address 0x4 - core index']
  #allocation1 [shape = 'u32[144,128]{1,0:T(1,128)}', space=vmem, size = 0x12000, scoped, tag = 'internal scratch']
  #allocation2 [shape = 's32[1]{0}', space=sflag, size = 0x4, scoped, tag = 'scoped memory for tpu_custom_call.1']
  #allocation3 [shape = 's32[1]{0:T(128)S(6)}', space=smem, size = 0x200, scoped, tag = 'prefetched SMEM operand 0']
  %s0 = inlined_call_operand.<no memory space> [shape: s32[1], index: 0, kind: input, shape index: {}]
  %s1 = inlined_call_operand.vmem [shape: f32[20,16], index: 1, kind: input, shape index: {}]
  %s2 = inlined_call_operand.hbm [shape: f32[24,128], index: 2, kind: output, shape index: {}]
  %s3 = sld [smem:[#allocation0]]
  $region37: #{tpu_custom_call.1} parent=0
    _
  %s5 = ssub.s32 1, %s3
  %s6 = scalar_select 0, %s5, %s3
  %7 = sst [smem:[#allocation3]] %s0
  $region1: #{tpu_custom_call.1} parent=0
    #allocation4 [shape = 'u8[8192]{0}', space=vmem, size = 0x2000, scoped, tag = 'output window, operand 0']
    #allocation5 [shape = 's32[2]{0}', space=sflag, size = 0x8, scoped, tag = 'scoped memory for tpu_custom_call.1']
    %8 = vsyncpa [#allocation5], 0
    %s9 = scalar_lea.sflag [#allocation5], 1
    %10 = vsyncpa %s9, 0
    loop: start=0, step=1, limit=5
    $region2: #{tpu_custom_call.1} parent=1 // loop_pre_header
      _
    $region3: #{tpu_custom_call.1} parent=1 // loop_header
      %s12 = sphi 0, %s16
      %p13 = scmp.ge.s32.totalorder %s12, 5
      %s22 = sphi 0, %s24
      %s25 = sphi 0, %s22
      %s26 = sphi 0, %s25
      %s42 = sphi 0, %s26
      %s48 = sphi 0, %s50
      %s51 = sphi 0, %s48
      %s52 = sphi 0, %s51
      %s68 = sphi 0, %s52
    $region4: #{tpu_custom_call.1} parent=1 // loop_header_branch
      %15 = sbr.rel (%p13) target = $region8
    $region5: #{tpu_custom_call.1} parent=1 // loop_body
      %s17 = ssub.s32 %s12, 1
      %s18 = ssub.s32 %s12, 2
      %s19 = sadd.s32 %s12, 1
      %s20 = ssub.s32 %s12, %s19
      %p21 = scmp.eq.s32.totalorder %s20, 0
      %s23 = sadd.s32 %s22, 1
      %s24 = scalar_select %p21, %s22, %s23
      %p27 = pneg %p21
      %p28 = scmp.eq.s32.totalorder %s12, 2
      %p29 = por %p27, %p28
      %p30 = scmp.ne.s32.totalorder %s22, %s25
      %p31 = scmp.eq.s32.totalorder %s12, 0
      %p32 = por %p30, %p31
      %p33 = scmp.ne.s32.totalorder %s22, %s25
      %p34 = scmp.eq.s32.totalorder %s17, 2
      %p35 = por %p33, %p34
      %p36 = scmp.ne.s32.totalorder %s25, %s26
      %p37 = scmp.eq.s32.totalorder %s17, 0
      %p38 = por %p36, %p37
      %p39 = scmp.ne.s32.totalorder %s25, %s26
      %p40 = scmp.eq.s32.totalorder %s18, 2
      %p41 = por %p39, %p40
      %p43 = scmp.ne.s32.totalorder %s26, %s42
      %p44 = scmp.eq.s32.totalorder %s18, 0
      %p45 = por %p43, %p44
      %s46 = ssub.s32 %s12, %s19
      %p47 = scmp.eq.s32.totalorder %s46, 0
      %s49 = sadd.s32 %s48, 1
      %s50 = scalar_select %p47, %s48, %s49
      %p53 = pneg %p47
      %p54 = scmp.eq.s32.totalorder %s12, 2
      %p55 = por %p53, %p54
      %p56 = scmp.ne.s32.totalorder %s48, %s51
      %p57 = scmp.eq.s32.totalorder %s12, 0
      %p58 = por %p56, %p57
      %p59 = scmp.ne.s32.totalorder %s48, %s51
      %p60 = scmp.eq.s32.totalorder %s17, 2
      %p61 = por %p59, %p60
      %p62 = scmp.ne.s32.totalorder %s51, %s52
      %p63 = scmp.eq.s32.totalorder %s17, 0
      %p64 = por %p62, %p63
      %p65 = scmp.ne.s32.totalorder %s51, %s52
      %p66 = scmp.eq.s32.totalorder %s18, 2
      %p67 = por %p65, %p66
      %p69 = scmp.ne.s32.totalorder %s52, %s68
      %p70 = scmp.eq.s32.totalorder %s18, 0
      %p71 = por %p69, %p70
      %p72 = scmp.le.s32.totalorder 1, %s12
      %p73 = scmp.lt.s32.totalorder %s12, 4
      %p74 = pnand %p72, %p73
      %p75 = pneg %p74
      // Predicated region
      $region9: #{tpu_custom_call.1} parent=5 // pred_check
        _
      $region10: #{tpu_custom_call.1} parent=5 // pred_check_branch
        %77 = sbr.rel (%p74) target = $region12
      $region11: #{tpu_custom_call.1} parent=5 // pred_region
        %s78 = ssub.s32 %s12, 1
      $region12: #{tpu_custom_call.1} parent=5 // pred_fallthru
        _
      %p79 = scmp.lt.s32.totalorder %s12, 3
      // Predicated region
      $region13: #{tpu_custom_call.1} parent=5 // pred_check
        %p80 = pneg %p79
      $region14: #{tpu_custom_call.1} parent=5 // pred_check_branch
        %82 = sbr.rel (%p80) target = $region16
      $region15: #{tpu_custom_call.1} parent=5 // pred_region
        // Predicated region
        $region17: #{tpu_custom_call.1} parent=15 // pred_check
          %p83 = pneg %p32
        $region18: #{tpu_custom_call.1} parent=15 // pred_check_branch
          %85 = sbr.rel (%p83) target = $region20
        $region19: #{tpu_custom_call.1} parent=15 // pred_region
          %p86 = scmp.lt.s32.totalorder %s12, 2
          %s87 = scalar_select %p86, %s12, 2
          %s88 = smul.addr %s87, 8
          %s89 = scalar_lea.vmem %s1, %s88
        $region20: #{tpu_custom_call.1} parent=15 // pred_fallthru
          _
      $region16: #{tpu_custom_call.1} parent=5 // pred_fallthru
        _
      %p90 = scmp.le.s32.totalorder 1, %s12
      %p91 = scmp.lt.s32.totalorder %s12, 4
      %p92 = pnand %p90, %p91
      %p93 = pneg %p92
      // Predicated region
      $region21: #{tpu_custom_call.1} parent=5 // pred_check
        _
      $region22: #{tpu_custom_call.1} parent=5 // pred_check_branch
        %95 = sbr.rel (%p92) target = $region24
      $region23: #{tpu_custom_call.1} parent=5 // pred_region
        %s96 = ssub.s32 %s12, 1
        %p97 = scmp.lt.s32.totalorder %s17, 2
        %s98 = scalar_select %p97, %s17, 2
        %s99 = smul.addr %s98, 8
        %s100 = scalar_lea.vmem %s1, %s99
        %p101 = pneg %p38
        %p102 = pneg %p35
        %p103 = pneg %p64
        %p104 = pneg %p61
        %s105 = sand.u32 %s51, 1
        %s106 = scalar_lea.sflag [#allocation5], %s105
        %s107 = sand.u32 %s51, 1
        %s108 = smul.addr %s107, 8
        %s109 = scalar_lea.vmem [#allocation4], %s108
        %p110 = scmp.lt.s32.totalorder %s17, 2
        %s111 = scalar_select %p110, %s17, 2
        %s112 = smul.addr %s111, 8
        %s113 = scalar_lea.vmem %s1, %s112
        %v114 = vld [vmem:[%s113] sm:$0xff]
        %vm115 = vcmask 130048
        %v116 = vsel %vm115, %v114, -inf
        %117 = vmax.xlane.f32.xlu0 %v116
        %v118 = vpop.xlane.xlu0 %117
        %v119 = vsub.f32 %v114, %v118
        %v120 = vmul.f32 %v119, 1.442695
        %v121 = vpow.pop %v120
        %v122 = vsel %vm115, %v121, 0.0
        %123 = vadd.xlane.f32.xlu0 %v122
        %v124 = vpop.xlane.xlu0 %123
        %v125 = vlaneseq
        %v126 = vand.u32 %v125, 127
        %s127 = sld [smem:[#allocation3]]
        %v128 = vstv %s127
        %vm129 = vcmp.eq.s32.totalorder %v126, %v128
        %v130 = vsel %vm129, 1, 0
        %vm131 = vcmp.eq.s32.totalorder %v130, 1
        %v132 = vsel %vm131, %v114, 0.0
        %v133 = vsel %vm115, %v132, 0.0
        %134 = vadd.xlane.f32.xlu0 %v133
        %v135 = vpop.xlane.xlu0 %134
        %v136 = vsub.f32 %v135, %v118
        %v137 = vmul.f32 %v136, 1.442695
        %v138 = vpow.pop %v137
        %v139 = vrcp.pop %v124
        %v140 = vmul.f32 %v138, %v139
        %v141 = vsub.f32 1.0, %v140
        %v142 = vadd.f32 %v141, 0.0001
        %v143 = vlog2.pop %v142
        %v144 = vmul.f32 %v143, 0.6931472
        %v145 = vsub.f32 0.0, %v144
        %s146 = smul.u32 %s17, 8
        %v147 = vlaneseq
        %v148 = vshrl.u32 %v147, 7
        %v149 = vstv %s146
        %v150 = vadd.s32 %v149, %v148
        %vm151 = vcmp.lt.s32.totalorder %v150, 20
        %v152 = vsel %vm151, %v145, 0.0
        %vm153 = vcmask 7168
        %v154 = vsel %vm153, %v152, 0.0
        %155 = vadd.xlane.f32.xlu0 %v154
        %v156 = vpop.xlane.xlu0 %155
        %v157 = vrot.slane %v156, 4
        %v158 = vadd.f32 %v156, %v157
        %v159 = vrot.slane %v158, 2
        %v160 = vadd.f32 %v158, %v159
        %v161 = vrot.slane %v160, 1
        %v162 = vadd.f32 %v160, %v161
        %s163 = vtos %v162
        %v164 = vstv %s163
        %165 = vst [vmem:[%s109] sm:$0xff] %v164
        %s166 = sand.u32 %s51, 1
        %s167 = scalar_lea.sflag [#allocation5], %s166
        %s168 = sand.u32 %s51, 1
        %s169 = smul.addr %s168, 8
        %s170 = scalar_lea.vmem [#allocation4], %s169
        // Predicated region
        $region25: #{tpu_custom_call.1} parent=23 // pred_check
          %p171 = pneg %p61
        $region26: #{tpu_custom_call.1} parent=23 // pred_check_branch
          %173 = sbr.rel (%p171) target = $region28
        $region27: #{tpu_custom_call.1} parent=23 // pred_region
          %s175 = ssub.s32 128, 128
          %176 = vsyncadd %s167, %s175
          %s177 = smul.addr %s17, 128
          %s178 = scalar_lea.hbm %s2, %s177
          %s180 = sshll.u32 %s170, 4
          %s181 = int_to_ptr.vmem [resolvable:$true] %s180
          %183 = dma.vmem_to_hbm [thread:$0]  %s181, 128, %s178, %s167
        $region28: #{tpu_custom_call.1} parent=23 // pred_fallthru
          _
      $region24: #{tpu_custom_call.1} parent=5 // pred_fallthru
        _
      %p184 = scmp.le.s32.totalorder 2, %s12
      // Predicated region
      $region29: #{tpu_custom_call.1} parent=5 // pred_check
        %p185 = pneg %p184
      $region30: #{tpu_custom_call.1} parent=5 // pred_check_branch
        %187 = sbr.rel (%p185) target = $region32
      $region31: #{tpu_custom_call.1} parent=5 // pred_region
        %s188 = ssub.s32 %s12, 2
        // Predicated region
        $region33: #{tpu_custom_call.1} parent=31 // pred_check
          %p189 = pneg %p67
        $region34: #{tpu_custom_call.1} parent=31 // pred_check_branch
          %191 = sbr.rel (%p189) target = $region36
        $region35: #{tpu_custom_call.1} parent=31 // pred_region
          %s192 = sand.u32 %s52, 1
          %s193 = scalar_lea.sflag [#allocation5], %s192
          %s194 = sand.u32 %s52, 1
          %s195 = smul.addr %s194, 8
          %s196 = scalar_lea.vmem [#allocation4], %s195
          %197 = dma.done %s193, 128
        $region36: #{tpu_custom_call.1} parent=31 // pred_fallthru
          _
      $region32: #{tpu_custom_call.1} parent=5 // pred_fallthru
        _
    $region6: #{tpu_custom_call.1} parent=1 // loop_footer
      %s16 = sadd.s32 1, %s12
    $region7: #{tpu_custom_call.1} parent=1 // loop_footer_branch
      %11 = sbr.rel target = $region3
    $region8: #{tpu_custom_call.1} parent=1 // loop_exit
      _
    %198 = vsyncpa [#allocation5], 1
    %s199 = scalar_lea.sflag [#allocation5], 1
    %200 = vsyncpa %s199, 1

</llo_original>
